<compile_context>
chip_gen: v5e
topology: v5e:2x2
jax: 0.10.0
libtpu: 0.0.40
codegen_flags: <defaults>
</compile_context>

<pallas_src>
import jax
import jax.numpy as jnp
from jax.experimental import pallas as pl
from jax.experimental.pallas import tpu as pltpu

IN_CHANNELS = 4
OUT_CHANNELS = 32
P = 8                      # pixels packed per row -> output lane width 256
TM_MAX = 4096              # packed-row tile (~4.5 MiB of HBM traffic / step)


def _round_up(v, q):
    return (v + q - 1) // q * q


def _feature_kernel(x_ref, w_ref, b_ref, o_ref):
    # x_ref: (TM, P*IN)    packed pixels (P pixels per row)
    # w_ref: (P*IN, P*OUT) block-diagonal weight (VMEM-resident)
    # b_ref: (1, P*OUT)    tiled bias (VMEM-resident)
    # o_ref: (TM, P*OUT)   lane-dense output
    y = jnp.dot(x_ref[...], w_ref[...], preferred_element_type=jnp.float32)
    o_ref[...] = (y + b_ref[...]).astype(o_ref.dtype)


def feature_extractor_forward(x, s, t, w, b):
    """Pallas equivalent of FeatureExtractor.forward.

    x: (B, H, W, C_total) with C_total >= IN_CHANNELS, float32
    s, t: unused auxiliary args (API parity with the base class)
    w: (IN_CHANNELS, OUT_CHANNELS), b: (OUT_CHANNELS,)
    returns: (B, H, W, OUT_CHANNELS)
    """
    assert x.ndim == 4, x.shape
    assert x.shape[-1] >= IN_CHANNELS, x.shape[-1]
    batch, hdim, wdim, _ = x.shape
    m = batch * hdim * wdim

    # Slice unused channels in the wrapper (don't DMA bytes we discard).
    x_in = x[..., :IN_CHANNELS].reshape(m, IN_CHANNELS)

    # --- choose packing / tiling (all static shape math) -------------------
    # Pixel count must be a multiple of P*8 so packed rows obey the (8, lane)
    # sublane constraint.
    m_rows = _round_up(m, P * 8) // P            # packed rows, multiple of 8

    # Balanced row tiling: grid * tm == padded rows (no partial blocks, at
    # most tm-8 extra padded rows of work).
    num_tiles = pl.cdiv(m_rows, TM_MAX)
    tm = _round_up(pl.cdiv(m_rows, num_tiles), 8)
    m_rows_padded = num_tiles * tm
    m_pad = m_rows_padded * P

    if m_pad != m:
        x_in = jnp.pad(x_in, ((0, m_pad - m), (0, 0)))

    # Pack P consecutive pixels per row (pure row-major reshape — free).
    x_packed = x_in.reshape(m_rows_padded, P * IN_CHANNELS)

    # Block-diagonal weight: output col p*OUT+o of row r is pixel (r*P+p) @ w.
    w_block = jnp.kron(jnp.eye(P, dtype=w.dtype), w)           # (P*IN, P*OUT)
    b_block = jnp.tile(b.reshape(1, OUT_CHANNELS), (1, P))     # (1, P*OUT)

    cost = pl.CostEstimate(
        flops=2 * m_rows_padded * (P * IN_CHANNELS) * (P * OUT_CHANNELS),
        transcendentals=0,
        bytes_accessed=(m_rows_padded * P * IN_CHANNELS * 4
                        + m_rows_padded * P * OUT_CHANNELS * 4
                        + P * IN_CHANNELS * P * OUT_CHANNELS * 4),
    )

    out_packed = pl.pallas_call(
        _feature_kernel,
        out_shape=jax.ShapeDtypeStruct((m_rows_padded, P * OUT_CHANNELS),
                                       jnp.float32),
        grid_spec=pltpu.PrefetchScalarGridSpec(
            num_scalar_prefetch=0,
            grid=(num_tiles,),
            in_specs=[
                pl.BlockSpec((tm, P * IN_CHANNELS), lambda i: (i, 0)),
                pl.BlockSpec((P * IN_CHANNELS, P * OUT_CHANNELS),
                             lambda i: (0, 0)),
                pl.BlockSpec((1, P * OUT_CHANNELS), lambda i: (0, 0)),
            ],
            out_specs=pl.BlockSpec((tm, P * OUT_CHANNELS), lambda i: (i, 0)),
        ),
        compiler_params=pltpu.CompilerParams(
            dimension_semantics=("parallel",),
            vmem_limit_bytes=32 * 1024 * 1024,
        ),
        cost_estimate=cost,
    )(x_packed, w_block, b_block)

    # Unpack: (rows, P*OUT) -> (m_pad, OUT) is the same contiguous memory.
    out_flat = out_packed.reshape(m_pad, OUT_CHANNELS)[:m]
    out = out_flat.reshape(batch, hdim, wdim, OUT_CHANNELS)

    # forward() contract asserts
    assert out.ndim == 4
    assert out.shape[0] == batch, out.shape[0]
    assert out.shape[-1] == OUT_CHANNELS, out.shape[-1]
    return out


if __name__ == "__main__":
    key = jax.random.PRNGKey(0)
    kx, kw, kb = jax.random.split(key, 3)

    # Small shapes: batch=2, spatial 16x16, 8 total channels (>= in_channels=4)
    B, H, W, C_TOTAL = 2, 16, 16, 8
    x = jax.random.normal(kx, (B, H, W, C_TOTAL), dtype=jnp.float32)
    s = jnp.float32(0.0)  # auxiliary args (no semantics in the base class)
    t = jnp.float32(1.0)

    w = jax.random.normal(kw, (IN_CHANNELS, OUT_CHANNELS), dtype=jnp.float32) * 0.1
    b = jax.random.normal(kb, (OUT_CHANNELS,), dtype=jnp.float32) * 0.01

    fwd = jax.jit(feature_extractor_forward)
    out = fwd(x, s, t, w, b)
    out = jax.block_until_ready(out)

    # Reference check in plain JAX
    ref = x[:, :, :, :IN_CHANNELS] @ w + b
    assert out.shape == (B, H, W, OUT_CHANNELS), out.shape
    assert jnp.allclose(out, ref, atol=1e-5, rtol=1e-5), float(
        jnp.max(jnp.abs(out - ref)))

    print("KERNEL_OK")
</pallas_src>

<mosaic_0001>
module attributes {stable_mosaic.version = 11 : i64} {
  func.func @_feature_kernel(%arg0: i32, %arg1: memref<64x32xf32, #tpu.memory_space<vmem>>, %arg2: memref<32x256xf32, #tpu.memory_space<vmem>>, %arg3: memref<1x256xf32, #tpu.memory_space<vmem>>, %arg4: memref<64x256xf32, #tpu.memory_space<vmem>>) attributes {dimension_semantics = [#tpu.dimension_semantics<parallel>], iteration_bounds = array<i64: 1>, scalar_prefetch = 0 : i64, scratch_operands = 0 : i64, tpu.core_type = #tpu.core_type<tc>, window_params = [{transform_indices = @transform_0, window_bounds = array<i64: 64, 32>}, {pipeline_mode = #tpu.pipeline_mode<synchronous>, transform_indices = @transform_1, window_bounds = array<i64: 32, 256>}, {pipeline_mode = #tpu.pipeline_mode<synchronous>, transform_indices = @transform_2, window_bounds = array<i64: 1, 256>}, {transform_indices = @transform_3, window_bounds = array<i64: 64, 256>}]} {
    %c0 = arith.constant 0 : index
    %c0_0 = arith.constant 0 : index
    %0 = vector.load %arg1[%c0, %c0_0] : memref<64x32xf32, #tpu.memory_space<vmem>>, vector<64x32xf32>
    %c0_1 = arith.constant 0 : index
    %c0_2 = arith.constant 0 : index
    %1 = vector.load %arg2[%c0_1, %c0_2] : memref<32x256xf32, #tpu.memory_space<vmem>>, vector<32x256xf32>
    %cst = arith.constant dense<0.000000e+00> : vector<64x256xf32>
    %2 = tpu.matmul %0, %1, %cst {dimension_numbers = #tpu.dot_dimension_numbers<[1], [0], [0], [1], [0, 0, 1, 1], [], []>} : vector<64x32xf32>, vector<32x256xf32>, vector<64x256xf32> -> vector<64x256xf32>
    %c0_3 = arith.constant 0 : index
    %c0_4 = arith.constant 0 : index
    %3 = vector.load %arg3[%c0_3, %c0_4] : memref<1x256xf32, #tpu.memory_space<vmem>>, vector<1x256xf32>
    %4 = vector.broadcast %3 : vector<1x256xf32> to vector<64x256xf32>
    %5 = arith.addf %2, %4 : vector<64x256xf32>
    %c0_5 = arith.constant 0 : index
    %c0_6 = arith.constant 0 : index
    %6 = vector.load %arg4[%c0_5, %c0_6] : memref<64x256xf32, #tpu.memory_space<vmem>>, vector<64x256xf32>
    tpu.vector_store %arg4[%c0_5, %c0_6], %5 {strides = array<i32>} : memref<64x256xf32, #tpu.memory_space<vmem>>, vector<64x256xf32>,
    return
  }
  func.func @transform_0(%arg0: i32) -> (i32, i32) {
    %c0_i32 = arith.constant 0 : i32
    %c0_i32_0 = arith.constant 0 : i32
    return %arg0, %c0_i32 : i32, i32
  }
  func.func @transform_1(%arg0: i32) -> (i32, i32) {
    %c0_i32 = arith.constant 0 : i32
    %c0_i32_0 = arith.constant 0 : i32
    %c0_i32_1 = arith.constant 0 : i32
    return %c0_i32, %c0_i32_0 : i32, i32
  }
  func.func @transform_2(%arg0: i32) -> (i32, i32) {
    %c0_i32 = arith.constant 0 : i32
    %c0_i32_0 = arith.constant 0 : i32
    %c0_i32_1 = arith.constant 0 : i32
    return %c0_i32, %c0_i32_0 : i32, i32
  }
  func.func @transform_3(%arg0: i32) -> (i32, i32) {
    %c0_i32 = arith.constant 0 : i32
    %c0_i32_0 = arith.constant 0 : i32
    return %arg0, %c0_i32 : i32, i32
  }
}

</mosaic_0001>

<llo_original>
// kernel: feature_extractor_forward.1
$region0: #{feature_extractor_forward.1}
  #allocation0 [shape = 'u32[]', space=smem, size = 0x4, offset = 0x4, fixed_abs, tag = 'smem constant byte address 0x4 - core index']
  #allocation1 [shape = 'u32[72,128]{1,0:T(1,128)}', space=vmem, size = 0x9000, scoped, tag = 'internal scratch']
  %s0 = inlined_call_operand.vmem [shape: f32[64,32], index: 0, kind: input, shape index: {}]
  %s1 = inlined_call_operand.vmem [shape: f32[32,256], index: 1, kind: input, shape index: {}]
  %s2 = inlined_call_operand.vmem [shape: f32[1,256], index: 2, kind: input, shape index: {}]
  %s3 = inlined_call_operand.vmem [shape: f32[64,256], index: 3, kind: output, shape index: {}]
  %s4 = sld [smem:[#allocation0]]
  $region22: #{feature_extractor_forward.1} parent=0
    _
  %s6 = ssub.s32 1, %s4
  %s7 = scalar_select 0, %s6, %s4
  // Predicated region
  $region2: #{feature_extractor_forward.1} parent=0 // pred_check
    _
  $region3: #{feature_extractor_forward.1} parent=0 // pred_check_branch
    %9 = sbr.rel (0) target = $region5
  $region4: #{feature_extractor_forward.1} parent=0 // pred_region
    _
  $region5: #{feature_extractor_forward.1} parent=0 // pred_fallthru
    _
  // Predicated region
  $region6: #{feature_extractor_forward.1} parent=0 // pred_check
    _
  $region7: #{feature_extractor_forward.1} parent=0 // pred_check_branch
    %11 = sbr.rel (0) target = $region9
  $region8: #{feature_extractor_forward.1} parent=0 // pred_region
    _
  $region9: #{feature_extractor_forward.1} parent=0 // pred_fallthru
    _
  // Predicated region
  $region10: #{feature_extractor_forward.1} parent=0 // pred_check
    _
  $region11: #{feature_extractor_forward.1} parent=0 // pred_check_branch
    %13 = sbr.rel (0) target = $region13
  $region12: #{feature_extractor_forward.1} parent=0 // pred_region
    _
  $region13: #{feature_extractor_forward.1} parent=0 // pred_fallthru
    _
  %v14 = vld [vmem:[%s0] sm:$0xff]
  %v15 = vld [vmem:[%s0 + $0x8] sm:$0xff]
  %v16 = vld [vmem:[%s0 + $0x10] sm:$0xff]
  %v17 = vld [vmem:[%s0 + $0x18] sm:$0xff]
  %v18 = vld [vmem:[%s0 + $0x20] sm:$0xff]
  %v19 = vld [vmem:[%s0 + $0x28] sm:$0xff]
  %v20 = vld [vmem:[%s0 + $0x30] sm:$0xff]
  %v21 = vld [vmem:[%s0 + $0x38] sm:$0xff]
  %v22 = vld [vmem:[%s1] sm:$0xff]
  %v23 = vld [vmem:[%s1 + $0x8] sm:$0xff]
  %v24 = vld [vmem:[%s1 + $0x10] sm:$0xff]
  %v25 = vld [vmem:[%s1 + $0x18] sm:$0xff]
  %v26 = vld [vmem:[%s1 + $0x20] sm:$0xff]
  %v27 = vld [vmem:[%s1 + $0x28] sm:$0xff]
  %v28 = vld [vmem:[%s1 + $0x30] sm:$0xff]
  %v29 = vld [vmem:[%s1 + $0x38] sm:$0xff]
  %v30 = vld [vmem:[%s2] sm:$0x3]
  %v32 = vperm.slane %v30, 0
  %v33 = vperm.slane %v30, 1
  %vm36 = vcmask 261120
  %v38 = vsel %vm36, %v14, 0
  %v41 = vsel %vm36, %v15, 0
  %v44 = vsel %vm36, %v16, 0
  %v47 = vsel %vm36, %v17, 0
  %v50 = vsel %vm36, %v18, 0
  %v53 = vsel %vm36, %v19, 0
  %v56 = vsel %vm36, %v20, 0
  %v59 = vsel %vm36, %v21, 0
  %61 = vmatpush.msra.mxu0 0.0
  %62 = vmatpush.msra.mxu0 0.0
  %63 = vmatpush.msra.mxu0 0.0
  %64 = vmatpush.msra.mxu0 0.0
  %65 = vmatpush.msra.mxu0 0.0
  %66 = vmatpush.msra.mxu0 0.0
  %67 = vmatpush.msra.mxu0 0.0
  %68 = vmatpush.msra.mxu0 0.0
  %69 = vmatpush.msra.mxu0 0.0
  %70 = vmatpush.msra.mxu0 0.0
  %71 = vmatpush.msra.mxu0 0.0
  %72 = vmatpush.msra.mxu0 0.0
  %73 = vmatpush.msra.mxu0 %v28
  %74 = vmatpush.msra.mxu0 %v26
  %75 = vmatpush.msra.mxu0 %v24
  %76 = vmatpush.msra.mxu0 %v22
  %77 = vmatmul.f32.gmra.mxu0 %v38
  %v78 = vpop.f32.mrf.mxu0
  %v79 = vadd.f32 %v32, %v78
  %80 = vmatmul.f32.gmra.mxu0 %v41
  %v81 = vpop.f32.mrf.mxu0
  %v82 = vadd.f32 %v32, %v81
  %83 = vmatmul.f32.gmra.mxu0 %v44
  %v84 = vpop.f32.mrf.mxu0
  %v85 = vadd.f32 %v32, %v84
  %86 = vmatmul.f32.gmra.mxu0 %v47
  %v87 = vpop.f32.mrf.mxu0
  %v88 = vadd.f32 %v32, %v87
  %89 = vmatmul.f32.gmra.mxu0 %v50
  %v90 = vpop.f32.mrf.mxu0
  %v91 = vadd.f32 %v32, %v90
  %92 = vmatmul.f32.gmra.mxu0 %v53
  %v93 = vpop.f32.mrf.mxu0
  %v94 = vadd.f32 %v32, %v93
  %95 = vmatmul.f32.gmra.mxu0 %v56
  %v96 = vpop.f32.mrf.mxu0
  %v97 = vadd.f32 %v32, %v96
  %98 = vmatmul.f32.gmra.mxu0 %v59
  %v99 = vpop.f32.mrf.mxu0
  %v100 = vadd.f32 %v32, %v99
  %101 = vdwg.mxu0
  %102 = vmatpush.msra.mxu0 0.0
  %103 = vmatpush.msra.mxu0 0.0
  %104 = vmatpush.msra.mxu0 0.0
  %105 = vmatpush.msra.mxu0 0.0
  %106 = vmatpush.msra.mxu0 0.0
  %107 = vmatpush.msra.mxu0 0.0
  %108 = vmatpush.msra.mxu0 0.0
  %109 = vmatpush.msra.mxu0 0.0
  %110 = vmatpush.msra.mxu0 0.0
  %111 = vmatpush.msra.mxu0 0.0
  %112 = vmatpush.msra.mxu0 0.0
  %113 = vmatpush.msra.mxu0 0.0
  %114 = vmatpush.msra.mxu0 %v29
  %115 = vmatpush.msra.mxu0 %v27
  %116 = vmatpush.msra.mxu0 %v25
  %117 = vmatpush.msra.mxu0 %v23
  %118 = vmatmul.f32.gmra.mxu0 %v38
  %v119 = vpop.f32.mrf.mxu0
  %v120 = vadd.f32 %v33, %v119
  %121 = vmatmul.f32.gmra.mxu0 %v41
  %v122 = vpop.f32.mrf.mxu0
  %v123 = vadd.f32 %v33, %v122
  %124 = vmatmul.f32.gmra.mxu0 %v44
  %v125 = vpop.f32.mrf.mxu0
  %v126 = vadd.f32 %v33, %v125
  %127 = vmatmul.f32.gmra.mxu0 %v47
  %v128 = vpop.f32.mrf.mxu0
  %v129 = vadd.f32 %v33, %v128
  %130 = vmatmul.f32.gmra.mxu0 %v50
  %v131 = vpop.f32.mrf.mxu0
  %v132 = vadd.f32 %v33, %v131
  %133 = vmatmul.f32.gmra.mxu0 %v53
  %v134 = vpop.f32.mrf.mxu0
  %v135 = vadd.f32 %v33, %v134
  %136 = vmatmul.f32.gmra.mxu0 %v56
  %v137 = vpop.f32.mrf.mxu0
  %v138 = vadd.f32 %v33, %v137
  %139 = vmatmul.f32.gmra.mxu0 %v59
  %v140 = vpop.f32.mrf.mxu0
  %v141 = vadd.f32 %v33, %v140
  %142 = vdwg.mxu0
  %143 = vst [vmem:[%s3] sm:$0xff] %v79
  %144 = vst [vmem:[%s3 + $0x8] sm:$0xff] %v120
  %145 = vst [vmem:[%s3 + $0x10] sm:$0xff] %v82
  %146 = vst [vmem:[%s3 + $0x18] sm:$0xff] %v123
  %147 = vst [vmem:[%s3 + $0x20] sm:$0xff] %v85
  %148 = vst [vmem:[%s3 + $0x28] sm:$0xff] %v126
  %149 = vst [vmem:[%s3 + $0x30] sm:$0xff] %v88
  %150 = vst [vmem:[%s3 + $0x38] sm:$0xff] %v129
  %151 = vst [vmem:[%s3 + $0x40] sm:$0xff] %v91
  %152 = vst [vmem:[%s3 + $0x48] sm:$0xff] %v132
  %153 = vst [vmem:[%s3 + $0x50] sm:$0xff] %v94
  %154 = vst [vmem:[%s3 + $0x58] sm:$0xff] %v135
  %155 = vst [vmem:[%s3 + $0x60] sm:$0xff] %v97
  %156 = vst [vmem:[%s3 + $0x68] sm:$0xff] %v138
  %157 = vst [vmem:[%s3 + $0x70] sm:$0xff] %v100
  %158 = vst [vmem:[%s3 + $0x78] sm:$0xff] %v141
  // Predicated region
  $region14: #{feature_extractor_forward.1} parent=0 // pred_check
    _
  $region15: #{feature_extractor_forward.1} parent=0 // pred_check_branch
    %160 = sbr.rel (0) target = $region17
  $region16: #{feature_extractor_forward.1} parent=0 // pred_region
    _
  $region17: #{feature_extractor_forward.1} parent=0 // pred_fallthru
    _
  // Predicated region
  $region18: #{feature_extractor_forward.1} parent=0 // pred_check
    _
  $region19: #{feature_extractor_forward.1} parent=0 // pred_check_branch
    %162 = sbr.rel (0) target = $region21
  $region20: #{feature_extractor_forward.1} parent=0 // pred_region
    _
  $region21: #{feature_extractor_forward.1} parent=0 // pred_fallthru
    _

</llo_original>
